<compile_context>
chip_gen: v7x
topology: tpu7x:2x2x1
jax: 0.10.0
libtpu: 0.0.40
codegen_flags: <defaults>
</compile_context>

<pallas_src>
import functools

import jax
import jax.numpy as jnp
from jax.experimental import pallas as pl
from jax.experimental.pallas import tpu as pltpu


def _triplet_kernel(a_ref, p_ref, n_ref, o_ref, *,
                    margin, bsz, tile_rows, num_pos, feat_dim,
                    distance_measure, pnorm):
    b = pl.program_id(0)

    a = a_ref[...].astype(jnp.float32)                       # (tile_rows, Dp)

    # Padded-row mask (only the last tile can contain padding; the mask is a
    # (tile_rows, 1) column so its cost is negligible next to the D-wide
    # reductions, hence applied unconditionally).
    row_idx = b * tile_rows + jax.lax.broadcasted_iota(
        jnp.int32, (tile_rows, 1), 0)
    valid = row_idx < bsz

    if distance_measure == 'cosine':
        aa = jnp.sum(a * a, axis=-1, keepdims=True)
        inv_a = jax.lax.rsqrt(jnp.maximum(aa, 1e-24))

    total = jnp.float32(0.0)
    for i in range(num_pos):                                  # static unroll
        lo = i * feat_dim
        hi = (i + 1) * feat_dim
        p = p_ref[:, lo:hi].astype(jnp.float32)               # (tile_rows, Dp)
        n = n_ref[:, lo:hi].astype(jnp.float32)

        if distance_measure == 'cosine':
            pp = jnp.sum(p * p, axis=-1, keepdims=True)
            nn = jnp.sum(n * n, axis=-1, keepdims=True)
            ap = jnp.sum(a * p, axis=-1, keepdims=True)
            an = jnp.sum(a * n, axis=-1, keepdims=True)
            cos_ap = ap * inv_a * jax.lax.rsqrt(jnp.maximum(pp, 1e-24))
            cos_an = an * inv_a * jax.lax.rsqrt(jnp.maximum(nn, 1e-24))
            # (1 - cos_ap) - (1 - cos_an) + margin == cos_an - cos_ap + margin
            hinge = jnp.maximum(cos_an - cos_ap + margin, 0.0)
        else:  # 'norm'  (F.pairwise_distance, eps=1e-6)
            dp_ = a - p + 1e-6
            dn_ = a - n + 1e-6
            if pnorm == 2:
                d_ap = jnp.sqrt(jnp.sum(dp_ * dp_, axis=-1, keepdims=True))
                d_an = jnp.sqrt(jnp.sum(dn_ * dn_, axis=-1, keepdims=True))
            else:
                d_ap = jnp.power(
                    jnp.sum(jnp.power(jnp.abs(dp_), pnorm), axis=-1,
                            keepdims=True), 1.0 / pnorm)
                d_an = jnp.power(
                    jnp.sum(jnp.power(jnp.abs(dn_), pnorm), axis=-1,
                            keepdims=True), 1.0 / pnorm)
            hinge = jnp.maximum(d_ap - d_an + margin, 0.0)

        total = total + jnp.sum(jnp.where(valid, hinge, 0.0))

    # Lane/sublane-aligned partial-sum slab; host reads [:, 0, 0].
    o_ref[...] = jnp.full((1, 8, 128), total, dtype=jnp.float32)


def triplet_loss(anchor, positive, negative, *,
                 distance_measure='cosine', margin=1.0,
                 num_pos=1, num_neg=1, pnorm=2,
                 max_tile_rows=1024, vmem_input_budget=40 << 20):
    assert num_pos == num_neg, 'num_neg must equal num_pos'
    assert distance_measure in ('cosine', 'norm')

    bsz = anchor.shape[0]
    # Flatten trailing dims (free reshapes, no data movement).
    a = anchor.reshape(bsz, -1)
    p = positive.reshape(bsz, num_pos, -1)
    n = negative.reshape(bsz, num_neg, -1)
    D = a.shape[1]
    assert p.shape[2] == D and n.shape[2] == D

    # Pad feature dim to a multiple of 128 (lane-dense loads / slices).
    Dp = ((D + 127) // 128) * 128
    if Dp != D:
        a = jnp.pad(a, ((0, 0), (0, Dp - D)))
        p = jnp.pad(p, ((0, 0), (0, 0), (0, Dp - D)))
        n = jnp.pad(n, ((0, 0), (0, 0), (0, Dp - D)))
    # Free reshapes: (bsz, num_pos, Dp) -> (bsz, num_pos*Dp).
    p2 = p.reshape(bsz, num_pos * Dp)
    n2 = n.reshape(bsz, num_neg * Dp)

    # Tile-size selection: largest multiple of 8 whose double-buffered
    # input footprint fits the budget (also fits v7x's 64 MiB VMEM).
    itemsize = jnp.dtype(a.dtype).itemsize
    bytes_per_row = Dp * (1 + 2 * num_pos) * itemsize          # a + p + n
    t = vmem_input_budget // (2 * bytes_per_row)
    t = max(8, (t // 8) * 8)
    t = min(t, max_tile_rows)
    bsz8 = ((bsz + 7) // 8) * 8
    tile_rows = int(min(t, bsz8))

    n_tiles = (bsz + tile_rows - 1) // tile_rows
    bsz_pad = n_tiles * tile_rows
    if bsz_pad != bsz:
        a = jnp.pad(a, ((0, bsz_pad - bsz), (0, 0)))
        p2 = jnp.pad(p2, ((0, bsz_pad - bsz), (0, 0)))
        n2 = jnp.pad(n2, ((0, bsz_pad - bsz), (0, 0)))

    kernel = functools.partial(
        _triplet_kernel,
        margin=float(margin), bsz=bsz, tile_rows=tile_rows,
        num_pos=num_pos, feat_dim=Dp,
        distance_measure=distance_measure, pnorm=float(pnorm))

    per_block_bytes = tile_rows * bytes_per_row
    vmem_limit = int(min(60 << 20, max(32 << 20,
                                       2 * per_block_bytes + (12 << 20))))

    row_spec_a = pl.BlockSpec((tile_rows, Dp), lambda i: (i, 0))
    row_spec_pn = pl.BlockSpec((tile_rows, num_pos * Dp), lambda i: (i, 0))

    partials = pl.pallas_call(
        kernel,
        out_shape=jax.ShapeDtypeStruct((n_tiles, 8, 128), jnp.float32),
        grid_spec=pltpu.PrefetchScalarGridSpec(
            num_scalar_prefetch=0,
            grid=(n_tiles,),
            in_specs=[row_spec_a, row_spec_pn, row_spec_pn],
            out_specs=pl.BlockSpec((1, 8, 128), lambda i: (i, 0, 0)),
        ),
        compiler_params=pltpu.CompilerParams(
            dimension_semantics=("parallel",),
            vmem_limit_bytes=vmem_limit),
    )(a, p2, n2)

    return jnp.sum(partials[:, 0, 0]) / num_pos / bsz


def _reference(anchor, positive, negative, *, margin, num_pos, num_neg,
               distance_measure='cosine', pnorm=2):
    # Pure-JAX reference mirroring the PyTorch code.
    bsz = anchor.shape[0]
    a = anchor.reshape(bsz, -1)
    p = positive.reshape(bsz, positive.shape[1], -1)
    n = negative.reshape(bsz, negative.shape[1], -1)
    if distance_measure == 'cosine':
        a = a / jnp.maximum(jnp.linalg.norm(a, axis=1, keepdims=True), 1e-12)
        p = p / jnp.maximum(jnp.linalg.norm(p, axis=2, keepdims=True), 1e-12)
        n = n / jnp.maximum(jnp.linalg.norm(n, axis=2, keepdims=True), 1e-12)
    a_r = jnp.tile(a, (num_pos, 1))
    p_r = jnp.transpose(p, (1, 0, 2)).reshape(num_pos * bsz, -1)
    n_r = jnp.transpose(n, (1, 0, 2)).reshape(num_neg * bsz, -1)
    if distance_measure == 'cosine':
        def cs(x, y):
            num = jnp.sum(x * y, axis=1)
            nx = jnp.maximum(jnp.linalg.norm(x, axis=1), 1e-8)
            ny = jnp.maximum(jnp.linalg.norm(y, axis=1), 1e-8)
            return num / (nx * ny)
        d_ap = 1 - cs(a_r, p_r)
        d_an = 1 - cs(a_r, n_r)
    else:
        d_ap = jnp.sum(jnp.abs(a_r - p_r + 1e-6) ** pnorm, axis=1) ** (1.0 / pnorm)
        d_an = jnp.sum(jnp.abs(a_r - n_r + 1e-6) ** pnorm, axis=1) ** (1.0 / pnorm)
    losses = jnp.maximum(d_ap - d_an + margin, 0.0)
    return losses.sum() / num_pos / bsz


if __name__ == "__main__":
    key = jax.random.PRNGKey(0)
    k1, k2, k3 = jax.random.split(key, 3)

    bsz, num_pos, num_neg = 4, 2, 2
    # Multi-dim embeddings (flattened inside): feature dim = 4*32 = 128
    anchor = jax.random.normal(k1, (bsz, 4, 32), dtype=jnp.float32)
    positive = jax.random.normal(k2, (bsz, num_pos, 4, 32), dtype=jnp.float32)
    negative = jax.random.normal(k3, (bsz, num_neg, 4, 32), dtype=jnp.float32)

    # cosine path
    loss_cos = triplet_loss(anchor, positive, negative,
                            distance_measure='cosine', margin=1.0,
                            num_pos=num_pos, num_neg=num_neg)
    loss_cos = jax.block_until_ready(loss_cos)
    ref_cos = _reference(anchor, positive, negative, margin=1.0,
                         num_pos=num_pos, num_neg=num_neg,
                         distance_measure='cosine')
    assert jnp.allclose(loss_cos, ref_cos, atol=1e-5, rtol=1e-5), (loss_cos, ref_cos)

    # norm path (p = 2)
    loss_nrm = triplet_loss(anchor, positive, negative,
                            distance_measure='norm', margin=1.0,
                            num_pos=num_pos, num_neg=num_neg, pnorm=2)
    loss_nrm = jax.block_until_ready(loss_nrm)
    ref_nrm = _reference(anchor, positive, negative, margin=1.0,
                         num_pos=num_pos, num_neg=num_neg,
                         distance_measure='norm', pnorm=2)
    assert jnp.allclose(loss_nrm, ref_nrm, atol=1e-5, rtol=1e-5), (loss_nrm, ref_nrm)

    print("KERNEL_OK")
</pallas_src>

<mosaic_0001>
module attributes {stable_mosaic.version = 11 : i64} {
  func.func @_triplet_kernel(%arg0: i32, %arg1: memref<8x128xf32, #tpu.memory_space<vmem>>, %arg2: memref<8x256xf32, #tpu.memory_space<vmem>>, %arg3: memref<8x256xf32, #tpu.memory_space<vmem>>, %arg4: memref<1x8x128xf32, #tpu.memory_space<vmem>>) attributes {dimension_semantics = [#tpu.dimension_semantics<parallel>], iteration_bounds = array<i64: 1>, scalar_prefetch = 0 : i64, scratch_operands = 0 : i64, tpu.core_type = #tpu.core_type<tc>, window_params = [{transform_indices = @transform_0, window_bounds = array<i64: 8, 128>}, {transform_indices = @transform_1, window_bounds = array<i64: 8, 256>}, {transform_indices = @transform_2, window_bounds = array<i64: 8, 256>}, {transform_indices = @transform_3, window_bounds = array<i64: 1, 8, 128>}]} {
    %c0 = arith.constant 0 : index
    %c0_0 = arith.constant 0 : index
    %0 = vector.load %arg1[%c0, %c0_0] : memref<8x128xf32, #tpu.memory_space<vmem>>, vector<8x128xf32>
    %c8_i32 = arith.constant 8 : i32
    %1 = arith.muli %arg0, %c8_i32 : i32
    %2 = tpu.iota {dimensions = array<i32: 0>} : vector<8x1xi32>
    %3 = vector.broadcast %1 : i32 to vector<8x1xi32>
    %4 = arith.addi %3, %2 : vector<8x1xi32>
    %c4_i32 = arith.constant 4 : i32
    %5 = vector.broadcast %c4_i32 : i32 to vector<8x1xi32>
    %6 = arith.cmpi slt, %4, %5 : vector<8x1xi32>
    %7 = arith.mulf %0, %0 : vector<8x128xf32>
    %cst = arith.constant dense<0.000000e+00> : vector<8xf32>
    %8 = vector.multi_reduction <add>, %7, %cst [1] : vector<8x128xf32> to vector<8xf32>
    %9 = vector.shape_cast %8 : vector<8xf32> to vector<8x1xf32>
    %cst_1 = arith.constant 1.000000e-24 : f32
    %10 = vector.broadcast %cst_1 : f32 to vector<8x1xf32>
    %11 = arith.maximumf %9, %10 : vector<8x1xf32>
    %12 = math.rsqrt %11 : vector<8x1xf32>
    %c0_2 = arith.constant 0 : index
    %c0_3 = arith.constant 0 : index
    %13 = vector.load %arg2[%c0_2, %c0_3] : memref<8x256xf32, #tpu.memory_space<vmem>>, vector<8x128xf32>
    %c0_4 = arith.constant 0 : index
    %c0_5 = arith.constant 0 : index
    %14 = vector.load %arg3[%c0_4, %c0_5] : memref<8x256xf32, #tpu.memory_space<vmem>>, vector<8x128xf32>
    %15 = arith.mulf %13, %13 : vector<8x128xf32>
    %cst_6 = arith.constant dense<0.000000e+00> : vector<8xf32>
    %16 = vector.multi_reduction <add>, %15, %cst_6 [1] : vector<8x128xf32> to vector<8xf32>
    %17 = vector.shape_cast %16 : vector<8xf32> to vector<8x1xf32>
    %18 = arith.mulf %14, %14 : vector<8x128xf32>
    %cst_7 = arith.constant dense<0.000000e+00> : vector<8xf32>
    %19 = vector.multi_reduction <add>, %18, %cst_7 [1] : vector<8x128xf32> to vector<8xf32>
    %20 = vector.shape_cast %19 : vector<8xf32> to vector<8x1xf32>
    %21 = arith.mulf %0, %13 : vector<8x128xf32>
    %cst_8 = arith.constant dense<0.000000e+00> : vector<8xf32>
    %22 = vector.multi_reduction <add>, %21, %cst_8 [1] : vector<8x128xf32> to vector<8xf32>
    %23 = vector.shape_cast %22 : vector<8xf32> to vector<8x1xf32>
    %24 = arith.mulf %0, %14 : vector<8x128xf32>
    %cst_9 = arith.constant dense<0.000000e+00> : vector<8xf32>
    %25 = vector.multi_reduction <add>, %24, %cst_9 [1] : vector<8x128xf32> to vector<8xf32>
    %26 = vector.shape_cast %25 : vector<8xf32> to vector<8x1xf32>
    %27 = arith.mulf %23, %12 : vector<8x1xf32>
    %cst_10 = arith.constant 1.000000e-24 : f32
    %28 = vector.broadcast %cst_10 : f32 to vector<8x1xf32>
    %29 = arith.maximumf %17, %28 : vector<8x1xf32>
    %30 = math.rsqrt %29 : vector<8x1xf32>
    %31 = arith.mulf %27, %30 : vector<8x1xf32>
    %32 = arith.mulf %26, %12 : vector<8x1xf32>
    %cst_11 = arith.constant 1.000000e-24 : f32
    %33 = vector.broadcast %cst_11 : f32 to vector<8x1xf32>
    %34 = arith.maximumf %20, %33 : vector<8x1xf32>
    %35 = math.rsqrt %34 : vector<8x1xf32>
    %36 = arith.mulf %32, %35 : vector<8x1xf32>
    %37 = arith.subf %36, %31 : vector<8x1xf32>
    %cst_12 = arith.constant 1.000000e+00 : f32
    %38 = vector.broadcast %cst_12 : f32 to vector<8x1xf32>
    %39 = arith.addf %37, %38 : vector<8x1xf32>
    %cst_13 = arith.constant 0.000000e+00 : f32
    %40 = vector.broadcast %cst_13 : f32 to vector<8x1xf32>
    %41 = arith.maximumf %39, %40 : vector<8x1xf32>
    %cst_14 = arith.constant 0.000000e+00 : f32
    %42 = vector.broadcast %cst_14 : f32 to vector<8x1xf32>
    %43 = arith.select %6, %41, %42 : vector<8x1xi1>, vector<8x1xf32>
    %44 = vector.shape_cast %43 : vector<8x1xf32> to vector<1x8x1xf32>
    %cst_15 = arith.constant dense<0.000000e+00> : vector<1xf32>
    %45 = vector.multi_reduction <add>, %44, %cst_15 [1, 2] : vector<1x8x1xf32> to vector<1xf32>
    %46 = vector.shape_cast %45 : vector<1xf32> to vector<1x1x1xf32>
    %47 = vector.extract %46[0, 0, 0] : f32 from vector<1x1x1xf32>
    %cst_16 = arith.constant 0.000000e+00 : f32
    %48 = arith.addf %cst_16, %47 : f32
    %c0_17 = arith.constant 0 : index
    %c128 = arith.constant 128 : index
    %49 = vector.load %arg2[%c0_17, %c128] : memref<8x256xf32, #tpu.memory_space<vmem>>, vector<8x128xf32>
    %c0_18 = arith.constant 0 : index
    %c128_19 = arith.constant 128 : index
    %50 = vector.load %arg3[%c0_18, %c128_19] : memref<8x256xf32, #tpu.memory_space<vmem>>, vector<8x128xf32>
    %51 = arith.mulf %49, %49 : vector<8x128xf32>
    %cst_20 = arith.constant dense<0.000000e+00> : vector<8xf32>
    %52 = vector.multi_reduction <add>, %51, %cst_20 [1] : vector<8x128xf32> to vector<8xf32>
    %53 = vector.shape_cast %52 : vector<8xf32> to vector<8x1xf32>
    %54 = arith.mulf %50, %50 : vector<8x128xf32>
    %cst_21 = arith.constant dense<0.000000e+00> : vector<8xf32>
    %55 = vector.multi_reduction <add>, %54, %cst_21 [1] : vector<8x128xf32> to vector<8xf32>
    %56 = vector.shape_cast %55 : vector<8xf32> to vector<8x1xf32>
    %57 = arith.mulf %0, %49 : vector<8x128xf32>
    %cst_22 = arith.constant dense<0.000000e+00> : vector<8xf32>
    %58 = vector.multi_reduction <add>, %57, %cst_22 [1] : vector<8x128xf32> to vector<8xf32>
    %59 = vector.shape_cast %58 : vector<8xf32> to vector<8x1xf32>
    %60 = arith.mulf %0, %50 : vector<8x128xf32>
    %cst_23 = arith.constant dense<0.000000e+00> : vector<8xf32>
    %61 = vector.multi_reduction <add>, %60, %cst_23 [1] : vector<8x128xf32> to vector<8xf32>
    %62 = vector.shape_cast %61 : vector<8xf32> to vector<8x1xf32>
    %63 = arith.mulf %59, %12 : vector<8x1xf32>
    %cst_24 = arith.constant 1.000000e-24 : f32
    %64 = vector.broadcast %cst_24 : f32 to vector<8x1xf32>
    %65 = arith.maximumf %53, %64 : vector<8x1xf32>
    %66 = math.rsqrt %65 : vector<8x1xf32>
    %67 = arith.mulf %63, %66 : vector<8x1xf32>
    %68 = arith.mulf %62, %12 : vector<8x1xf32>
    %cst_25 = arith.constant 1.000000e-24 : f32
    %69 = vector.broadcast %cst_25 : f32 to vector<8x1xf32>
    %70 = arith.maximumf %56, %69 : vector<8x1xf32>
    %71 = math.rsqrt %70 : vector<8x1xf32>
    %72 = arith.mulf %68, %71 : vector<8x1xf32>
    %73 = arith.subf %72, %67 : vector<8x1xf32>
    %cst_26 = arith.constant 1.000000e+00 : f32
    %74 = vector.broadcast %cst_26 : f32 to vector<8x1xf32>
    %75 = arith.addf %73, %74 : vector<8x1xf32>
    %cst_27 = arith.constant 0.000000e+00 : f32
    %76 = vector.broadcast %cst_27 : f32 to vector<8x1xf32>
    %77 = arith.maximumf %75, %76 : vector<8x1xf32>
    %cst_28 = arith.constant 0.000000e+00 : f32
    %78 = vector.broadcast %cst_28 : f32 to vector<8x1xf32>
    %79 = arith.select %6, %77, %78 : vector<8x1xi1>, vector<8x1xf32>
    %80 = vector.shape_cast %79 : vector<8x1xf32> to vector<1x8x1xf32>
    %cst_29 = arith.constant dense<0.000000e+00> : vector<1xf32>
    %81 = vector.multi_reduction <add>, %80, %cst_29 [1, 2] : vector<1x8x1xf32> to vector<1xf32>
    %82 = vector.shape_cast %81 : vector<1xf32> to vector<1x1x1xf32>
    %83 = vector.extract %82[0, 0, 0] : f32 from vector<1x1x1xf32>
    %84 = arith.addf %48, %83 : f32
    %85 = vector.broadcast %84 : f32 to vector<1x8x128xf32>
    %c0_30 = arith.constant 0 : index
    %c0_31 = arith.constant 0 : index
    %c0_32 = arith.constant 0 : index
    %86 = vector.load %arg4[%c0_30, %c0_31, %c0_32] : memref<1x8x128xf32, #tpu.memory_space<vmem>>, vector<1x8x128xf32>
    tpu.vector_store %arg4[%c0_30, %c0_31, %c0_32], %85 {strides = array<i32>} : memref<1x8x128xf32, #tpu.memory_space<vmem>>, vector<1x8x128xf32>,
    return
  }
  func.func @transform_0(%arg0: i32) -> (i32, i32) {
    %c0_i32 = arith.constant 0 : i32
    %c0_i32_0 = arith.constant 0 : i32
    return %arg0, %c0_i32 : i32, i32
  }
  func.func @transform_1(%arg0: i32) -> (i32, i32) {
    %c0_i32 = arith.constant 0 : i32
    %c0_i32_0 = arith.constant 0 : i32
    return %arg0, %c0_i32 : i32, i32
  }
  func.func @transform_2(%arg0: i32) -> (i32, i32) {
    %c0_i32 = arith.constant 0 : i32
    %c0_i32_0 = arith.constant 0 : i32
    return %arg0, %c0_i32 : i32, i32
  }
  func.func @transform_3(%arg0: i32) -> (i32, i32, i32) {
    %c0_i32 = arith.constant 0 : i32
    %c0_i32_0 = arith.constant 0 : i32
    %c0_i32_1 = arith.constant 0 : i32
    return %arg0, %c0_i32, %c0_i32_0 : i32, i32, i32
  }
}

</mosaic_0001>

<llo_original>
// kernel: tpu_custom_call.1
$region0: #{tpu_custom_call.1}
  #allocation0 [shape = 'u32[]', space=smem, size = 0x4, offset = 0x4, fixed_abs, tag = 'smem constant byte address 0x4 - core index']
  #allocation1 [shape = 'u32[144,128]{1,0:T(1,128)}', space=vmem, size = 0x12000, scoped, tag = 'internal scratch']
  %s0 = inlined_call_operand.hbm [shape: f32[8,128], index: 0, kind: input, shape index: {}]
  %s1 = inlined_call_operand.hbm [shape: f32[8,256], index: 1, kind: input, shape index: {}]
  %s2 = inlined_call_operand.hbm [shape: f32[8,256], index: 2, kind: input, shape index: {}]
  %s3 = inlined_call_operand.hbm [shape: f32[1,8,128], index: 3, kind: output, shape index: {}]
  %s4 = sld [smem:[#allocation0]]
  $region34: #{tpu_custom_call.1} parent=0
    _
  %s6 = ssub.s32 1, %s4
  %s7 = scalar_select 0, %s6, %s4
  $region1: #{tpu_custom_call.1} parent=0
    #allocation2 [shape = 'u8[4096]{0}', space=vmem, size = 0x1000, scoped, tag = 'input window, operand 0, single buffered']
    #allocation3 [shape = 's32[1]{0}', space=sflag, size = 0x4, scoped, tag = 'scoped memory for tpu_custom_call.1']
    #allocation4 [shape = 's32[1]{0}', space=sflag, size = 0x4, scoped, tag = 'scoped memory for tpu_custom_call.1']
    #allocation5 [shape = 'u8[8192]{0}', space=vmem, size = 0x2000, scoped, tag = 'input window, operand 1, single buffered']
    #allocation6 [shape = 's32[1]{0}', space=sflag, size = 0x4, scoped, tag = 'scoped memory for tpu_custom_call.1']
    #allocation7 [shape = 'u8[8192]{0}', space=vmem, size = 0x2000, scoped, tag = 'input window, operand 2, single buffered']
    #allocation8 [shape = 'u8[4096]{0}', space=vmem, size = 0x1000, scoped, tag = 'output window, operand 0, single buffered']
    %8 = vsyncpa [#allocation3], 0
    %9 = vsyncpa [#allocation6], 0
    %10 = vsyncpa [#allocation4], 0
    // Predicated region
    $region2: #{tpu_custom_call.1} parent=1 // pred_check
      _
    $region3: #{tpu_custom_call.1} parent=1 // pred_check_branch
      %12 = sbr.rel (0) target = $region5
    $region4: #{tpu_custom_call.1} parent=1 // pred_region
      %s14 = ssub.s32 128, 128
      %15 = vsyncadd [#allocation3], %s14
      %s17 = sshll.u32 [#allocation2], 4
      %s18 = int_to_ptr.vmem [resolvable:$true] %s17
      %20 = dma.hbm_to_vmem [thread:$0]  %s0, 128, %s18, [#allocation3]
    $region5: #{tpu_custom_call.1} parent=1 // pred_fallthru
      _
    // Predicated region
    $region6: #{tpu_custom_call.1} parent=1 // pred_check
      _
    $region7: #{tpu_custom_call.1} parent=1 // pred_check_branch
      %22 = sbr.rel (0) target = $region9
    $region8: #{tpu_custom_call.1} parent=1 // pred_region
      %s24 = ssub.s32 256, 256
      %25 = vsyncadd [#allocation6], %s24
      %s27 = sshll.u32 [#allocation5], 4
      %s28 = int_to_ptr.vmem [resolvable:$true] %s27
      %30 = dma.hbm_to_vmem [thread:$0]  %s1, 256, %s28, [#allocation6]
    $region9: #{tpu_custom_call.1} parent=1 // pred_fallthru
      _
    // Predicated region
    $region10: #{tpu_custom_call.1} parent=1 // pred_check
      _
    $region11: #{tpu_custom_call.1} parent=1 // pred_check_branch
      %32 = sbr.rel (0) target = $region13
    $region12: #{tpu_custom_call.1} parent=1 // pred_region
      %s34 = ssub.s32 256, 256
      %35 = vsyncadd [#allocation6], %s34
      %s37 = sshll.u32 [#allocation7], 4
      %s38 = int_to_ptr.vmem [resolvable:$true] %s37
      %40 = dma.hbm_to_vmem [thread:$0]  %s2, 256, %s38, [#allocation6]
    $region13: #{tpu_custom_call.1} parent=1 // pred_fallthru
      _
    // Predicated region
    $region14: #{tpu_custom_call.1} parent=1 // pred_check
      _
    $region15: #{tpu_custom_call.1} parent=1 // pred_check_branch
      %42 = sbr.rel (0) target = $region17
    $region16: #{tpu_custom_call.1} parent=1 // pred_region
      %43 = dma.done [#allocation3], 128
    $region17: #{tpu_custom_call.1} parent=1 // pred_fallthru
      _
    // Predicated region
    $region18: #{tpu_custom_call.1} parent=1 // pred_check
      _
    $region19: #{tpu_custom_call.1} parent=1 // pred_check_branch
      %45 = sbr.rel (0) target = $region21
    $region20: #{tpu_custom_call.1} parent=1 // pred_region
      %46 = dma.done [#allocation6], 256
    $region21: #{tpu_custom_call.1} parent=1 // pred_fallthru
      _
    // Predicated region
    $region22: #{tpu_custom_call.1} parent=1 // pred_check
      _
    $region23: #{tpu_custom_call.1} parent=1 // pred_check_branch
      %48 = sbr.rel (0) target = $region25
    $region24: #{tpu_custom_call.1} parent=1 // pred_region
      %49 = dma.done [#allocation6], 256
    $region25: #{tpu_custom_call.1} parent=1 // pred_fallthru
      _
    %v50 = vld [vmem:[#allocation2] sm:$0xff]
    %s51 = smul.u32 0, 8
    %v52 = vlaneseq
    %v53 = vshrl.u32 %v52, 7
    %v54 = vstv %s51
    %v55 = vadd.s32 %v54, %v53
    %vm56 = vcmp.lt.s32.totalorder %v55, 4
    %v57 = vmul.f32 %v50, %v50
    %58 = vadd.xlane.f32.xlu0 %v57
    %v59 = vpop.xlane.xlu0 %58
    %v60 = vmax.f32 %v59, 1e-24
    %v61 = vrsqrt.pop %v60
    %v62 = vld [vmem:[#allocation5] sm:$0xff]
    %v63 = vld [vmem:[#allocation7] sm:$0xff]
    %v64 = vmul.f32 %v62, %v62
    %65 = vadd.xlane.f32.xlu0 %v64
    %v66 = vpop.xlane.xlu0 %65
    %v67 = vmul.f32 %v63, %v63
    %68 = vadd.xlane.f32.xlu0 %v67
    %v69 = vpop.xlane.xlu0 %68
    %v70 = vmul.f32 %v50, %v62
    %71 = vadd.xlane.f32.xlu0 %v70
    %v72 = vpop.xlane.xlu0 %71
    %v73 = vmul.f32 %v50, %v63
    %74 = vadd.xlane.f32.xlu0 %v73
    %v75 = vpop.xlane.xlu0 %74
    %v76 = vmul.f32 %v72, %v61
    %v77 = vmax.f32 %v66, 1e-24
    %v78 = vrsqrt.pop %v77
    %v79 = vmul.f32 %v76, %v78
    %v80 = vmul.f32 %v75, %v61
    %v81 = vmax.f32 %v69, 1e-24
    %v82 = vrsqrt.pop %v81
    %v83 = vmul.f32 %v80, %v82
    %v84 = vsub.f32 %v83, %v79
    %v85 = vadd.f32 %v84, 1.0
    %v86 = vmax.f32 %v85, 0.0
    %v87 = vsel %vm56, %v86, 0.0
    %vm88 = vcmask 7168
    %v89 = vsel %vm88, %v87, 0.0
    %90 = vadd.xlane.f32.xlu0 %v89
    %v91 = vpop.xlane.xlu0 %90
    %v92 = vrot.slane %v91, 4
    %v93 = vadd.f32 %v91, %v92
    %v94 = vrot.slane %v93, 2
    %v95 = vadd.f32 %v93, %v94
    %v96 = vrot.slane %v95, 1
    %v97 = vadd.f32 %v95, %v96
    %s98 = vtos %v97
    %s99 = sadd.f32 %s98, 0.0
    %v100 = vld [vmem:[#allocation5 + $0x8] sm:$0xff]
    %v101 = vld [vmem:[#allocation7 + $0x8] sm:$0xff]
    %v102 = vmul.f32 %v100, %v100
    %103 = vadd.xlane.f32.xlu0 %v102
    %v104 = vpop.xlane.xlu0 %103
    %v105 = vmul.f32 %v101, %v101
    %106 = vadd.xlane.f32.xlu0 %v105
    %v107 = vpop.xlane.xlu0 %106
    %v108 = vmul.f32 %v50, %v100
    %109 = vadd.xlane.f32.xlu0 %v108
    %v110 = vpop.xlane.xlu0 %109
    %v111 = vmul.f32 %v50, %v101
    %112 = vadd.xlane.f32.xlu0 %v111
    %v113 = vpop.xlane.xlu0 %112
    %v114 = vmul.f32 %v110, %v61
    %v115 = vmax.f32 %v104, 1e-24
    %v116 = vrsqrt.pop %v115
    %v117 = vmul.f32 %v114, %v116
    %v118 = vmul.f32 %v113, %v61
    %v119 = vmax.f32 %v107, 1e-24
    %v120 = vrsqrt.pop %v119
    %v121 = vmul.f32 %v118, %v120
    %v122 = vsub.f32 %v121, %v117
    %v123 = vadd.f32 %v122, 1.0
    %v124 = vmax.f32 %v123, 0.0
    %v125 = vsel %vm56, %v124, 0.0
    %v126 = vsel %vm88, %v125, 0.0
    %127 = vadd.xlane.f32.xlu0 %v126
    %v128 = vpop.xlane.xlu0 %127
    %v129 = vrot.slane %v128, 4
    %v130 = vadd.f32 %v128, %v129
    %v131 = vrot.slane %v130, 2
    %v132 = vadd.f32 %v130, %v131
    %v133 = vrot.slane %v132, 1
    %v134 = vadd.f32 %v132, %v133
    %s135 = vtos %v134
    %s136 = sadd.f32 %s99, %s135
    %v137 = vstv %s136
    %138 = vst [vmem:[#allocation8] sm:$0xff] %v137
    // Predicated region
    $region26: #{tpu_custom_call.1} parent=1 // pred_check
      _
    $region27: #{tpu_custom_call.1} parent=1 // pred_check_branch
      %140 = sbr.rel (0) target = $region29
    $region28: #{tpu_custom_call.1} parent=1 // pred_region
      %s142 = ssub.s32 128, 128
      %143 = vsyncadd [#allocation4], %s142
      %s145 = sshll.u32 [#allocation8], 4
      %s146 = int_to_ptr.vmem [resolvable:$true] %s145
      %148 = dma.vmem_to_hbm [thread:$0]  %s146, 128, %s3, [#allocation4]
    $region29: #{tpu_custom_call.1} parent=1 // pred_fallthru
      _
    // Predicated region
    $region30: #{tpu_custom_call.1} parent=1 // pred_check
      _
    $region31: #{tpu_custom_call.1} parent=1 // pred_check_branch
      %150 = sbr.rel (0) target = $region33
    $region32: #{tpu_custom_call.1} parent=1 // pred_region
      %151 = dma.done [#allocation4], 128
    $region33: #{tpu_custom_call.1} parent=1 // pred_fallthru
      _
    %152 = vsyncpa [#allocation3], 1
    %153 = vsyncpa [#allocation6], 1
    %154 = vsyncpa [#allocation4], 1

</llo_original>
